<compile_context>
chip_gen: v5e
topology: v5e:2x2
jax: 0.10.0
libtpu: 0.0.40
codegen_flags: <defaults>
</compile_context>

<pallas_src>
import functools

import jax
import jax.numpy as jnp
from jax.experimental import pallas as pl
from jax.experimental.pallas import tpu as pltpu

LN_EPS = 1e-5  # torch.nn.LayerNorm default


def _round_up(v: int, m: int) -> int:
    return (v + m - 1) // m * m


def _pick_feature_tile(d_pad: int, want: int) -> int:
    """Largest multiple of 128 that is <= want and divides d_pad."""
    t = min(_round_up(want, 128), d_pad)
    while d_pad % t:
        t -= 128
    return t


def _resblock_kernel(x_ref, w_ref, b_ref, g_ref, beta_ref, o_ref,
                     h_ref, acc_ref, *, inv_d, tn, tk, eps):
    j = pl.program_id(1)          # output-feature tile index
    k = pl.program_id(2)          # reduction tile index
    nk = pl.num_programs(2)

    # h = relu(LayerNorm(x)): computed once per batch tile, cached in bf16.
    @pl.when((j == 0) & (k == 0))
    def _():
        x = x_ref[...].astype(jnp.float32)
        # Single-pass LN stats.  Padded lanes of x are zero, so sums over the
        # padded tile equal sums over the true feature dim; inv_d = 1/true_D.
        s1 = jnp.sum(x, axis=-1, keepdims=True)
        s2 = jnp.sum(x * x, axis=-1, keepdims=True)
        mean = s1 * inv_d
        var = jnp.maximum(s2 * inv_d - mean * mean, 0.0)
        xn = (x - mean) * jax.lax.rsqrt(var + eps)
        xn = xn * g_ref[...] + beta_ref[...]          # padded gamma/beta are 0
        h_ref[...] = jnp.maximum(xn, 0.0).astype(h_ref.dtype)

    @pl.when(k == 0)
    def _():
        acc_ref[...] = jnp.zeros_like(acc_ref)

    # MXU matmul on bf16 inputs, f32 accumulation.
    k_off = pl.multiple_of(k * tk, 128)
    h_blk = h_ref[:, pl.ds(k_off, tk)]
    acc_ref[...] += jnp.dot(h_blk, w_ref[...], preferred_element_type=jnp.float32)

    # Finalize: bias + residual add, lane-dense output store.
    @pl.when(k == nk - 1)
    def _():
        n_off = pl.multiple_of(j * tn, 128)
        x_res = x_ref[:, pl.ds(n_off, tn)].astype(jnp.float32)
        y = acc_ref[...] + b_ref[...]
        o_ref[...] = (x_res + y).astype(o_ref.dtype)


def residual_block(x, w, b, gamma, beta, *, tm=256, tn=512, tk=512,
                   ln_eps=LN_EPS):
    """ResidualBlock forward: x + (relu(LayerNorm(x)) @ w + b).

    x: (N, D);  w: (D, D) = torch_weight.T (i.e. (in, out));  b/gamma/beta: (D,).
    """
    n, d = x.shape
    assert w.shape == (d, d), "residual add requires dim_in == dim_out"

    d_pad = _round_up(d, 128)                 # lane-dense feature dim
    tn = _pick_feature_tile(d_pad, tn)
    tk = _pick_feature_tile(d_pad, tk)
    tm = _round_up(min(tm, _round_up(n, 8)), 8)
    n_pad = _round_up(n, tm)

    # Zero-pad.  Padded lanes of gamma/beta/bias/weight are zero => padded
    # lanes of h and of the output tile are exactly zero; sliced off below.
    x_p = jnp.pad(x, ((0, n_pad - n), (0, d_pad - d)))
    w_p = jnp.pad(w.astype(jnp.bfloat16), ((0, d_pad - d), (0, d_pad - d)))
    b_p = jnp.pad(b, (0, d_pad - d)).reshape(1, d_pad).astype(jnp.float32)
    g_p = jnp.pad(gamma, (0, d_pad - d)).reshape(1, d_pad).astype(jnp.float32)
    be_p = jnp.pad(beta, (0, d_pad - d)).reshape(1, d_pad).astype(jnp.float32)

    grid = (n_pad // tm, d_pad // tn, d_pad // tk)

    x_bytes = x_p.dtype.itemsize
    o_bytes = x.dtype.itemsize
    vmem_est = (
        2 * tm * d_pad * x_bytes       # x blocks (double-buffered)
        + 2 * tk * tn * 2              # bf16 weight blocks
        + 2 * tm * tn * o_bytes        # output blocks
        + 2 * 3 * d_pad * 4            # bias / gamma / beta blocks (tiny)
        + tm * d_pad * 2               # h scratch (bf16)
        + tm * tn * 4                  # f32 accumulator
    )
    vmem_limit = int(min(max(2 * vmem_est, 32 * 1024 * 1024), 96 * 1024 * 1024))

    kernel = functools.partial(_resblock_kernel, inv_d=1.0 / d, tn=tn, tk=tk,
                               eps=ln_eps)

    out = pl.pallas_call(
        kernel,
        out_shape=jax.ShapeDtypeStruct((n_pad, d_pad), x.dtype),
        grid_spec=pltpu.PrefetchScalarGridSpec(
            num_scalar_prefetch=0,
            grid=grid,
            in_specs=[
                pl.BlockSpec((tm, d_pad), lambda i, j, k: (i, 0)),   # x (full row)
                pl.BlockSpec((tk, tn), lambda i, j, k: (k, j)),      # weight tile
                pl.BlockSpec((1, tn), lambda i, j, k: (0, j)),       # bias tile
                pl.BlockSpec((1, d_pad), lambda i, j, k: (0, 0)),    # ln gamma
                pl.BlockSpec((1, d_pad), lambda i, j, k: (0, 0)),    # ln beta
            ],
            out_specs=pl.BlockSpec((tm, tn), lambda i, j, k: (i, j)),
            scratch_shapes=[
                pltpu.VMEM((tm, d_pad), jnp.bfloat16),   # cached h = relu(LN(x))
                pltpu.VMEM((tm, tn), jnp.float32),       # matmul accumulator
            ],
        ),
        compiler_params=pltpu.CompilerParams(
            # Batch axis parallel (megacore); j/k carry scratch state.
            dimension_semantics=("parallel", "arbitrary", "arbitrary"),
            vmem_limit_bytes=vmem_limit,
        ),
    )(x_p, w_p, b_p, g_p, be_p)

    return out[:n, :d]


def residual_block_ref(x, w, b, gamma, beta, *, matmul_dtype=jnp.float32,
                       eps=LN_EPS):
    """Pure-JAX reference; matmul_dtype=jnp.bfloat16 mirrors the kernel's MXU inputs."""
    xf = x.astype(jnp.float32)
    mean = jnp.mean(xf, axis=-1, keepdims=True)
    msq = jnp.mean(xf * xf, axis=-1, keepdims=True)
    var = jnp.maximum(msq - mean * mean, 0.0)
    xn = (xf - mean) * jax.lax.rsqrt(var + eps) * gamma + beta
    h = jnp.maximum(xn, 0.0)
    y = jnp.dot(h.astype(matmul_dtype), w.astype(matmul_dtype),
                preferred_element_type=jnp.float32) + b
    return (xf + y).astype(x.dtype)


def _make_params(key, dim):
    kw, kb = jax.random.split(key)
    bound = 1.0 / float(dim) ** 0.5
    w_torch = jax.random.uniform(kw, (dim, dim), jnp.float32, -bound, bound)  # (out, in)
    w = w_torch.T                                                             # (in, out)
    b = jax.random.uniform(kb, (dim,), jnp.float32, -bound, bound)
    gamma = jnp.ones((dim,), jnp.float32)    # LayerNorm default weight
    beta = jnp.zeros((dim,), jnp.float32)    # LayerNorm default bias
    return w, b, gamma, beta


if __name__ == "__main__":
    key = jax.random.PRNGKey(0)
    k1, k2, k3, k4 = jax.random.split(key, 4)

    # Case 1: small shape consistent with the module (batch=16, dim=32).
    batch, dim = 16, 32
    x = jax.random.normal(k1, (batch, dim), dtype=jnp.float32)
    w, b, gamma, beta = _make_params(k2, dim)

    out = jax.block_until_ready(residual_block(x, w, b, gamma, beta))
    assert out.shape == x.shape and out.dtype == x.dtype
    ref_bf16 = residual_block_ref(x, w, b, gamma, beta, matmul_dtype=jnp.bfloat16)
    ref_f32 = residual_block_ref(x, w, b, gamma, beta, matmul_dtype=jnp.float32)
    assert jnp.allclose(out, ref_bf16, atol=5e-3, rtol=5e-3), "mismatch vs bf16 reference"
    assert jnp.allclose(out, ref_f32, atol=5e-2, rtol=5e-2), "mismatch vs f32 reference"

    # Case 2: exercises the multi-tile N/K grid, the f32 accumulator and the
    # cached-h reuse path (dim=1024 -> two 512 tiles on each of j and k).
    batch2, dim2 = 48, 1024
    x2 = jax.random.normal(k3, (batch2, dim2), dtype=jnp.float32)
    w2, b2, g2, be2 = _make_params(k4, dim2)
    out2 = jax.block_until_ready(residual_block(x2, w2, b2, g2, be2))
    ref2 = residual_block_ref(x2, w2, b2, g2, be2, matmul_dtype=jnp.bfloat16)
    assert jnp.allclose(out2, ref2, atol=5e-3, rtol=5e-3), "mismatch vs reference (tiled case)"

    print("KERNEL_OK")
</pallas_src>

<mosaic_0001>
module attributes {stable_mosaic.version = 11 : i64} {
  func.func @_resblock_kernel(%arg0: i32, %arg1: i32, %arg2: i32, %arg3: memref<16x128xf32, #tpu.memory_space<vmem>>, %arg4: memref<128x128xbf16, #tpu.memory_space<vmem>>, %arg5: memref<1x128xf32, #tpu.memory_space<vmem>>, %arg6: memref<1x128xf32, #tpu.memory_space<vmem>>, %arg7: memref<1x128xf32, #tpu.memory_space<vmem>>, %arg8: memref<16x128xf32, #tpu.memory_space<vmem>>, %arg9: memref<16x128xbf16, #tpu.memory_space<vmem>>, %arg10: memref<16x128xf32, #tpu.memory_space<vmem>>) attributes {dimension_semantics = [#tpu.dimension_semantics<parallel>, #tpu.dimension_semantics<arbitrary>, #tpu.dimension_semantics<arbitrary>], iteration_bounds = array<i64: 1, 1, 1>, scalar_prefetch = 0 : i64, scratch_operands = 2 : i64, tpu.core_type = #tpu.core_type<tc>, window_params = [{transform_indices = @transform_0, window_bounds = array<i64: 16, 128>}, {transform_indices = @transform_1, window_bounds = array<i64: 128, 128>}, {transform_indices = @transform_2, window_bounds = array<i64: 1, 128>}, {pipeline_mode = #tpu.pipeline_mode<synchronous>, transform_indices = @transform_3, window_bounds = array<i64: 1, 128>}, {pipeline_mode = #tpu.pipeline_mode<synchronous>, transform_indices = @transform_4, window_bounds = array<i64: 1, 128>}, {transform_indices = @transform_5, window_bounds = array<i64: 16, 128>}]} {
    %c0_i32 = arith.constant 0 : i32
    %0 = arith.cmpi eq, %arg1, %c0_i32 : i32
    %c0_i32_0 = arith.constant 0 : i32
    %1 = arith.cmpi eq, %arg2, %c0_i32_0 : i32
    %2 = arith.andi %0, %1 : i1
    %3 = arith.extui %2 : i1 to i32
    %c0_i32_1 = arith.constant 0 : i32
    %4 = arith.cmpi ne, %3, %c0_i32_1 : i32
    scf.if %4 {
      %c0_12 = arith.constant 0 : index
      %c0_13 = arith.constant 0 : index
      %20 = vector.load %arg3[%c0_12, %c0_13] : memref<16x128xf32, #tpu.memory_space<vmem>>, vector<16x128xf32>
      %cst_14 = arith.constant dense<0.000000e+00> : vector<16xf32>
      %21 = vector.multi_reduction <add>, %20, %cst_14 [1] : vector<16x128xf32> to vector<16xf32>
      %22 = vector.shape_cast %21 : vector<16xf32> to vector<16x1xf32>
      %23 = arith.mulf %20, %20 : vector<16x128xf32>
      %cst_15 = arith.constant dense<0.000000e+00> : vector<16xf32>
      %24 = vector.multi_reduction <add>, %23, %cst_15 [1] : vector<16x128xf32> to vector<16xf32>
      %25 = vector.shape_cast %24 : vector<16xf32> to vector<16x1xf32>
      %cst_16 = arith.constant 3.125000e-02 : f32
      %26 = vector.broadcast %cst_16 : f32 to vector<16x1xf32>
      %27 = arith.mulf %22, %26 : vector<16x1xf32>
      %cst_17 = arith.constant 3.125000e-02 : f32
      %28 = vector.broadcast %cst_17 : f32 to vector<16x1xf32>
      %29 = arith.mulf %25, %28 : vector<16x1xf32>
      %30 = arith.mulf %27, %27 : vector<16x1xf32>
      %31 = arith.subf %29, %30 : vector<16x1xf32>
      %cst_18 = arith.constant 0.000000e+00 : f32
      %32 = vector.broadcast %cst_18 : f32 to vector<16x1xf32>
      %33 = arith.maximumf %31, %32 : vector<16x1xf32>
      %34 = vector.broadcast %27 : vector<16x1xf32> to vector<16x128xf32>
      %35 = arith.subf %20, %34 : vector<16x128xf32>
      %cst_19 = arith.constant 9.99999974E-6 : f32
      %36 = vector.broadcast %cst_19 : f32 to vector<16x1xf32>
      %37 = arith.addf %33, %36 : vector<16x1xf32>
      %38 = math.rsqrt %37 : vector<16x1xf32>
      %39 = vector.broadcast %38 : vector<16x1xf32> to vector<16x128xf32>
      %40 = arith.mulf %35, %39 : vector<16x128xf32>
      %c0_20 = arith.constant 0 : index
      %c0_21 = arith.constant 0 : index
      %41 = vector.load %arg6[%c0_20, %c0_21] : memref<1x128xf32, #tpu.memory_space<vmem>>, vector<1x128xf32>
      %42 = vector.broadcast %41 : vector<1x128xf32> to vector<16x128xf32>
      %43 = arith.mulf %40, %42 : vector<16x128xf32>
      %c0_22 = arith.constant 0 : index
      %c0_23 = arith.constant 0 : index
      %44 = vector.load %arg7[%c0_22, %c0_23] : memref<1x128xf32, #tpu.memory_space<vmem>>, vector<1x128xf32>
      %45 = vector.broadcast %44 : vector<1x128xf32> to vector<16x128xf32>
      %46 = arith.addf %43, %45 : vector<16x128xf32>
      %cst_24 = arith.constant 0.000000e+00 : f32
      %47 = vector.broadcast %cst_24 : f32 to vector<16x128xf32>
      %48 = arith.maximumf %46, %47 : vector<16x128xf32>
      %49 = arith.truncf %48 : vector<16x128xf32> to vector<16x128xbf16>
      %c0_25 = arith.constant 0 : index
      %c0_26 = arith.constant 0 : index
      %50 = vector.load %arg9[%c0_25, %c0_26] : memref<16x128xbf16, #tpu.memory_space<vmem>>, vector<16x128xbf16>
      tpu.vector_store %arg9[%c0_25, %c0_26], %49 {strides = array<i32>} : memref<16x128xbf16, #tpu.memory_space<vmem>>, vector<16x128xbf16>,
    } else {
    }
    %c0_i32_2 = arith.constant 0 : i32
    %5 = arith.cmpi eq, %arg2, %c0_i32_2 : i32
    %6 = arith.extui %5 : i1 to i32
    %c0_i32_3 = arith.constant 0 : i32
    %7 = arith.cmpi ne, %6, %c0_i32_3 : i32
    scf.if %7 {
      %cst_12 = arith.constant 0.000000e+00 : f32
      %20 = vector.broadcast %cst_12 : f32 to vector<16x128xf32>
      %c0_13 = arith.constant 0 : index
      %c0_14 = arith.constant 0 : index
      %21 = vector.load %arg10[%c0_13, %c0_14] : memref<16x128xf32, #tpu.memory_space<vmem>>, vector<16x128xf32>
      tpu.vector_store %arg10[%c0_13, %c0_14], %20 {strides = array<i32>} : memref<16x128xf32, #tpu.memory_space<vmem>>, vector<16x128xf32>,
    } else {
    }
    %c128_i32 = arith.constant 128 : i32
    %8 = arith.muli %arg2, %c128_i32 : i32
    %9 = tpu.assume_multiple %8, 128 : i32
    %c0 = arith.constant 0 : index
    %10 = arith.index_cast %9 : i32 to index
    %11 = vector.load %arg9[%c0, %10] : memref<16x128xbf16, #tpu.memory_space<vmem>>, vector<16x128xbf16>
    %c0_4 = arith.constant 0 : index
    %c0_5 = arith.constant 0 : index
    %12 = vector.load %arg10[%c0_4, %c0_5] : memref<16x128xf32, #tpu.memory_space<vmem>>, vector<16x128xf32>
    %c0_6 = arith.constant 0 : index
    %c0_7 = arith.constant 0 : index
    %13 = vector.load %arg4[%c0_6, %c0_7] : memref<128x128xbf16, #tpu.memory_space<vmem>>, vector<128x128xbf16>
    %cst = arith.constant dense<0.000000e+00> : vector<16x128xf32>
    %14 = tpu.matmul %11, %13, %cst {dimension_numbers = #tpu.dot_dimension_numbers<[1], [0], [0], [1], [0, 0, 1, 1], [], []>} : vector<16x128xbf16>, vector<128x128xbf16>, vector<16x128xf32> -> vector<16x128xf32>
    %15 = arith.addf %12, %14 : vector<16x128xf32>
    %c0_8 = arith.constant 0 : index
    %c0_9 = arith.constant 0 : index
    %16 = vector.load %arg10[%c0_8, %c0_9] : memref<16x128xf32, #tpu.memory_space<vmem>>, vector<16x128xf32>
    tpu.vector_store %arg10[%c0_8, %c0_9], %15 {strides = array<i32>} : memref<16x128xf32, #tpu.memory_space<vmem>>, vector<16x128xf32>,
    %c0_i32_10 = arith.constant 0 : i32
    %17 = arith.cmpi eq, %arg2, %c0_i32_10 : i32
    %18 = arith.extui %17 : i1 to i32
    %c0_i32_11 = arith.constant 0 : i32
    %19 = arith.cmpi ne, %18, %c0_i32_11 : i32
    scf.if %19 {
      %c128_i32_12 = arith.constant 128 : i32
      %20 = arith.muli %arg1, %c128_i32_12 : i32
      %21 = tpu.assume_multiple %20, 128 : i32
      %c0_13 = arith.constant 0 : index
      %22 = arith.index_cast %21 : i32 to index
      %23 = vector.load %arg3[%c0_13, %22] : memref<16x128xf32, #tpu.memory_space<vmem>>, vector<16x128xf32>
      %c0_14 = arith.constant 0 : index
      %c0_15 = arith.constant 0 : index
      %24 = vector.load %arg10[%c0_14, %c0_15] : memref<16x128xf32, #tpu.memory_space<vmem>>, vector<16x128xf32>
      %c0_16 = arith.constant 0 : index
      %c0_17 = arith.constant 0 : index
      %25 = vector.load %arg5[%c0_16, %c0_17] : memref<1x128xf32, #tpu.memory_space<vmem>>, vector<1x128xf32>
      %26 = vector.broadcast %25 : vector<1x128xf32> to vector<16x128xf32>
      %27 = arith.addf %24, %26 : vector<16x128xf32>
      %28 = arith.addf %23, %27 : vector<16x128xf32>
      %c0_18 = arith.constant 0 : index
      %c0_19 = arith.constant 0 : index
      %29 = vector.load %arg8[%c0_18, %c0_19] : memref<16x128xf32, #tpu.memory_space<vmem>>, vector<16x128xf32>
      tpu.vector_store %arg8[%c0_18, %c0_19], %28 {strides = array<i32>} : memref<16x128xf32, #tpu.memory_space<vmem>>, vector<16x128xf32>,
    } else {
    }
    return
  }
  func.func @transform_0(%arg0: i32, %arg1: i32, %arg2: i32) -> (i32, i32) {
    %c0_i32 = arith.constant 0 : i32
    %c0_i32_0 = arith.constant 0 : i32
    return %arg0, %c0_i32 : i32, i32
  }
  func.func @transform_1(%arg0: i32, %arg1: i32, %arg2: i32) -> (i32, i32) {
    %c0_i32 = arith.constant 0 : i32
    return %arg2, %arg1 : i32, i32
  }
  func.func @transform_2(%arg0: i32, %arg1: i32, %arg2: i32) -> (i32, i32) {
    %c0_i32 = arith.constant 0 : i32
    %c0_i32_0 = arith.constant 0 : i32
    return %c0_i32, %arg1 : i32, i32
  }
  func.func @transform_3(%arg0: i32, %arg1: i32, %arg2: i32) -> (i32, i32) {
    %c0_i32 = arith.constant 0 : i32
    %c0_i32_0 = arith.constant 0 : i32
    %c0_i32_1 = arith.constant 0 : i32
    return %c0_i32, %c0_i32_0 : i32, i32
  }
  func.func @transform_4(%arg0: i32, %arg1: i32, %arg2: i32) -> (i32, i32) {
    %c0_i32 = arith.constant 0 : i32
    %c0_i32_0 = arith.constant 0 : i32
    %c0_i32_1 = arith.constant 0 : i32
    return %c0_i32, %c0_i32_0 : i32, i32
  }
  func.func @transform_5(%arg0: i32, %arg1: i32, %arg2: i32) -> (i32, i32) {
    %c0_i32 = arith.constant 0 : i32
    return %arg0, %arg1 : i32, i32
  }
}

</mosaic_0001>

<llo_original>
// kernel: tpu_custom_call.1
$region0: #{tpu_custom_call.1}
  #allocation0 [shape = 'u32[]', space=smem, size = 0x4, offset = 0x4, fixed_abs, tag = 'smem constant byte address 0x4 - core index']
  #allocation1 [shape = 'u32[72,128]{1,0:T(1,128)}', space=vmem, size = 0x9000, scoped, tag = 'internal scratch']
  #allocation2 [shape = 'bf16[16,128]{1,0:T(8,128)(2,1)}', space=vmem, size = 0x1000, scoped, tag = 'scratch operand']
  #allocation3 [shape = 'f32[16,128]{1,0:T(8,128)}', space=vmem, size = 0x2000, scoped, tag = 'scratch operand']
  %s0 = inlined_call_operand.hbm [shape: f32[16,128], index: 0, kind: input, shape index: {}]
  %s1 = inlined_call_operand.hbm [shape: bf16[128,128], index: 1, kind: input, shape index: {}]
  %s2 = inlined_call_operand.vmem [shape: f32[1,128], index: 2, kind: input, shape index: {}]
  %s3 = inlined_call_operand.vmem [shape: f32[1,128], index: 3, kind: input, shape index: {}]
  %s4 = inlined_call_operand.vmem [shape: f32[1,128], index: 4, kind: input, shape index: {}]
  %s5 = inlined_call_operand.hbm [shape: f32[16,128], index: 5, kind: output, shape index: {}]
  %s6 = sld [smem:[#allocation0]]
  $region50: #{tpu_custom_call.1} parent=0
    _
  %s8 = ssub.s32 1, %s6
  %s9 = scalar_select 0, %s8, %s6
  $region1: #{tpu_custom_call.1} parent=0
    #allocation4 [shape = 'u8[8192]{0}', space=vmem, size = 0x2000, scoped, tag = 'input window, operand 0, single buffered']
    #allocation5 [shape = 's32[1]{0}', space=sflag, size = 0x4, scoped, tag = 'scoped memory for tpu_custom_call.1']
    #allocation6 [shape = 's32[1]{0}', space=sflag, size = 0x4, scoped, tag = 'scoped memory for tpu_custom_call.1']
    #allocation7 [shape = 'u8[32768]{0}', space=vmem, size = 0x8000, scoped, tag = 'input window, operand 1, single buffered']
    #allocation8 [shape = 's32[1]{0}', space=sflag, size = 0x4, scoped, tag = 'scoped memory for tpu_custom_call.1']
    #allocation9 [shape = 'u8[8192]{0}', space=vmem, size = 0x2000, scoped, tag = 'output window, operand 0, single buffered']
    %10 = vsyncpa [#allocation5], 0
    %11 = vsyncpa [#allocation8], 0
    %12 = vsyncpa [#allocation6], 0
    // Predicated region
    $region2: #{tpu_custom_call.1} parent=1 // pred_check
      _
    $region3: #{tpu_custom_call.1} parent=1 // pred_check_branch
      %14 = sbr.rel (0) target = $region5
    $region4: #{tpu_custom_call.1} parent=1 // pred_region
      %16 = vsyncadd [#allocation5], 0
      %s17 = sshll.u32 %s0, 4
      %s18 = int_to_ptr.hbm [resolvable:$true] %s17
      %s19 = sshll.u32 [#allocation4], 4
      %s20 = int_to_ptr.vmem [resolvable:$true] %s19
      %25 = dma.hbm_to_vmem [thread:$0]  %s18, 256, %s20, [#allocation5], 128, 128, 8
    $region5: #{tpu_custom_call.1} parent=1 // pred_fallthru
      _
    // Predicated region
    $region6: #{tpu_custom_call.1} parent=1 // pred_check
      _
    $region7: #{tpu_custom_call.1} parent=1 // pred_check_branch
      %27 = sbr.rel (0) target = $region9
    $region8: #{tpu_custom_call.1} parent=1 // pred_region
      %29 = vsyncadd [#allocation8], 0
      %s30 = sshll.u32 %s1, 4
      %s31 = int_to_ptr.hbm [resolvable:$true] %s30
      %s32 = sshll.u32 [#allocation7], 4
      %s33 = int_to_ptr.vmem [resolvable:$true] %s32
      %38 = dma.hbm_to_vmem [thread:$0]  %s31, 1024, %s33, [#allocation8], 64, 64, 4
    $region9: #{tpu_custom_call.1} parent=1 // pred_fallthru
      _
    // Predicated region
    $region10: #{tpu_custom_call.1} parent=1 // pred_check
      _
    $region11: #{tpu_custom_call.1} parent=1 // pred_check_branch
      %40 = sbr.rel (0) target = $region13
    $region12: #{tpu_custom_call.1} parent=1 // pred_region
      _
    $region13: #{tpu_custom_call.1} parent=1 // pred_fallthru
      _
    // Predicated region
    $region14: #{tpu_custom_call.1} parent=1 // pred_check
      _
    $region15: #{tpu_custom_call.1} parent=1 // pred_check_branch
      %42 = sbr.rel (0) target = $region17
    $region16: #{tpu_custom_call.1} parent=1 // pred_region
      _
    $region17: #{tpu_custom_call.1} parent=1 // pred_fallthru
      _
    // Predicated region
    $region18: #{tpu_custom_call.1} parent=1 // pred_check
      _
    $region19: #{tpu_custom_call.1} parent=1 // pred_check_branch
      %44 = sbr.rel (0) target = $region21
    $region20: #{tpu_custom_call.1} parent=1 // pred_region
      _
    $region21: #{tpu_custom_call.1} parent=1 // pred_fallthru
      _
    // Predicated region
    $region22: #{tpu_custom_call.1} parent=1 // pred_check
      _
    $region23: #{tpu_custom_call.1} parent=1 // pred_check_branch
      %46 = sbr.rel (0) target = $region25
    $region24: #{tpu_custom_call.1} parent=1 // pred_region
      %48 = dma.done [#allocation5], 256
    $region25: #{tpu_custom_call.1} parent=1 // pred_fallthru
      _
    // Predicated region
    $region26: #{tpu_custom_call.1} parent=1 // pred_check
      _
    $region27: #{tpu_custom_call.1} parent=1 // pred_check_branch
      %50 = sbr.rel (0) target = $region29
    $region28: #{tpu_custom_call.1} parent=1 // pred_region
      %52 = dma.done [#allocation8], 1024
    $region29: #{tpu_custom_call.1} parent=1 // pred_fallthru
      _
    %p53 = scmp.eq.s32.totalorder 0, 0
    %p54 = scmp.eq.s32.totalorder 0, 0
    %p55 = pnand %p53, %p54
    %p56 = pneg %p55
    // Predicated region
    $region30: #{tpu_custom_call.1} parent=1 // pred_check
      _
    $region31: #{tpu_custom_call.1} parent=1 // pred_check_branch
      %58 = sbr.rel (%p55) target = $region33
    $region32: #{tpu_custom_call.1} parent=1 // pred_region
      %v59 = vld [vmem:[#allocation4] sm:$0xff]
      %v60 = vld [vmem:[#allocation4 + $0x8] sm:$0xff]
      %61 = vadd.xlane.f32.xlu0 %v59
      %v62 = vpop.xlane.xlu0 %61
      %63 = vadd.xlane.f32.xlu0 %v60
      %v64 = vpop.xlane.xlu0 %63
      %v65 = vmul.f32 %v59, %v59
      %v66 = vmul.f32 %v60, %v60
      %67 = vadd.xlane.f32.xlu0 %v65
      %v68 = vpop.xlane.xlu0 %67
      %69 = vadd.xlane.f32.xlu0 %v66
      %v70 = vpop.xlane.xlu0 %69
      %v71 = vmul.f32 %v62, 0.03125
      %v72 = vmul.f32 %v64, 0.03125
      %v73 = vmul.f32 %v68, 0.03125
      %v74 = vmul.f32 %v70, 0.03125
      %v75 = vmul.f32 %v71, %v71
      %v76 = vmul.f32 %v72, %v72
      %v77 = vsub.f32 %v73, %v75
      %v78 = vsub.f32 %v74, %v76
      %v79 = vmax.f32 %v77, 0.0
      %v80 = vmax.f32 %v78, 0.0
      %v81 = vsub.f32 %v59, %v71
      %v82 = vsub.f32 %v60, %v72
      %v83 = vadd.f32 %v79, 1e-05
      %v84 = vadd.f32 %v80, 1e-05
      %v85 = vrsqrt.pop %v83
      %v86 = vmul.f32 %v85, %v83
      %v87 = vmul.f32 %v86, %v85
      %v88 = vmul.f32 0.5, %v87
      %v89 = vsub.f32 1.5, %v88
      %v90 = vmul.f32 %v85, %v89
      %vm91 = vweird.f32 %v83
      %vm92 = vweird.f32 %v85
      %vm93 = vmor %vm91, %vm92
      %v94 = vsel %vm93, %v85, %v90
      %v95 = vrsqrt.pop %v84
      %v96 = vmul.f32 %v95, %v84
      %v97 = vmul.f32 %v96, %v95
      %v98 = vmul.f32 0.5, %v97
      %v99 = vsub.f32 1.5, %v98
      %v100 = vmul.f32 %v95, %v99
      %vm101 = vweird.f32 %v84
      %vm102 = vweird.f32 %v95
      %vm103 = vmor %vm101, %vm102
      %v104 = vsel %vm103, %v95, %v100
      %v105 = vmul.f32 %v81, %v94
      %v106 = vmul.f32 %v82, %v104
      %v107 = vld [vmem:[%s3] sm:$0x1]
      %v109 = vperm.slane %v107, 0
      %v111 = vmul.f32 %v105, %v109
      %v112 = vmul.f32 %v106, %v109
      %v113 = vld [vmem:[%s4] sm:$0x1]
      %v115 = vperm.slane %v113, 0
      %v117 = vadd.f32 %v111, %v115
      %v118 = vadd.f32 %v112, %v115
      %v119 = vmax.f32 %v117, 0.0
      %v120 = vmax.f32 %v118, 0.0
      %v121 = vpack.c.bf16 %v119, %v119
      %v122 = vpack.c.bf16 %v120, %v120
      %123 = vst [vmem:[#allocation2] sm:$0xf] %v121
      %124 = vst [vmem:[#allocation2 + $0x4] sm:$0xf] %v122
    $region33: #{tpu_custom_call.1} parent=1 // pred_fallthru
      _
    // Predicated region
    $region34: #{tpu_custom_call.1} parent=1 // pred_check
      %p125 = pneg %p54
    $region35: #{tpu_custom_call.1} parent=1 // pred_check_branch
      %127 = sbr.rel (%p125) target = $region37
    $region36: #{tpu_custom_call.1} parent=1 // pred_region
      %128 = vst [vmem:[#allocation3] sm:$0xff] 0.0
      %129 = vst [vmem:[#allocation3 + $0x8] sm:$0xff] 0.0
    $region37: #{tpu_custom_call.1} parent=1 // pred_fallthru
      _
    %s130 = smul.u32 0, 128
    %s131 = sshra.s32 %s130, 7
    %s132 = sand.u32 %s130, 127
    %s133 = smul.addr %s131, 4
    %s134 = scalar_lea.vmem [#allocation2], %s133
    %v135 = vld [vmem:[%s134] sm:$0xf]
    %v136 = vld [vmem:[%s134 + $0x4] sm:$0xf]
    %v137 = vld [vmem:[#allocation3] sm:$0xff]
    %v138 = vld [vmem:[#allocation3 + $0x8] sm:$0xff]
    %v139 = vld [vmem:[#allocation7] sm:$0xf]
    %v140 = vld [vmem:[#allocation7 + $0x4] sm:$0xf]
    %v141 = vld [vmem:[#allocation7 + $0x8] sm:$0xf]
    %v142 = vld [vmem:[#allocation7 + $0xc] sm:$0xf]
    %v143 = vld [vmem:[#allocation7 + $0x10] sm:$0xf]
    %v144 = vld [vmem:[#allocation7 + $0x14] sm:$0xf]
    %v145 = vld [vmem:[#allocation7 + $0x18] sm:$0xf]
    %v146 = vld [vmem:[#allocation7 + $0x1c] sm:$0xf]
    %v147 = vld [vmem:[#allocation7 + $0x20] sm:$0xf]
    %v148 = vld [vmem:[#allocation7 + $0x24] sm:$0xf]
    %v149 = vld [vmem:[#allocation7 + $0x28] sm:$0xf]
    %v150 = vld [vmem:[#allocation7 + $0x2c] sm:$0xf]
    %v151 = vld [vmem:[#allocation7 + $0x30] sm:$0xf]
    %v152 = vld [vmem:[#allocation7 + $0x34] sm:$0xf]
    %v153 = vld [vmem:[#allocation7 + $0x38] sm:$0xf]
    %v154 = vld [vmem:[#allocation7 + $0x3c] sm:$0xf]
    %v157 = vunpack.c.l.b16 %v135
    %v158 = vunpack.c.l.b16 %v136
    %v159 = vpack.c.b16 %v158, %v157
    %v177 = vunpack.c.l.b16 %v139
    %v178 = vunpack.c.l.b16 %v140
    %v179 = vunpack.c.l.b16 %v141
    %v180 = vunpack.c.l.b16 %v142
    %v181 = vunpack.c.l.b16 %v143
    %v182 = vunpack.c.l.b16 %v144
    %v183 = vunpack.c.l.b16 %v145
    %v184 = vunpack.c.l.b16 %v146
    %v185 = vunpack.c.l.b16 %v147
    %v186 = vunpack.c.l.b16 %v148
    %v187 = vunpack.c.l.b16 %v149
    %v188 = vunpack.c.l.b16 %v150
    %v189 = vunpack.c.l.b16 %v151
    %v190 = vunpack.c.l.b16 %v152
    %v191 = vunpack.c.l.b16 %v153
    %v192 = vunpack.c.l.b16 %v154
    %v193 = vpack.c.b16 %v178, %v177
    %v194 = vpack.c.b16 %v180, %v179
    %v195 = vpack.c.b16 %v182, %v181
    %v196 = vpack.c.b16 %v184, %v183
    %v197 = vpack.c.b16 %v186, %v185
    %v198 = vpack.c.b16 %v188, %v187
    %v199 = vpack.c.b16 %v190, %v189
    %v200 = vpack.c.b16 %v192, %v191
    %209 = vmatpush.bf16.msra.mxu0 %v200
    %210 = vmatpush.bf16.msra.mxu0 %v199
    %211 = vmatpush.bf16.msra.mxu0 %v198
    %212 = vmatpush.bf16.msra.mxu0 %v197
    %213 = vmatpush.bf16.msra.mxu0 %v196
    %214 = vmatpush.bf16.msra.mxu0 %v195
    %215 = vmatpush.bf16.msra.mxu0 %v194
    %216 = vmatpush.bf16.msra.mxu0 %v193
    %217 = vmatmul.bf16.gmra.mxu0 %v159
    %v218 = vpop.f32.mrf.mxu0
    %v219 = vadd.f32 0.0, %v218
    %v220 = vpop.f32.mrf.mxu0
    %v221 = vadd.f32 0.0, %v220
    %222 = vdwg.mxu0
    %v223 = vadd.f32 %v137, %v219
    %v224 = vadd.f32 %v138, %v221
    %225 = vst [vmem:[#allocation3] sm:$0xff] %v223
    %226 = vst [vmem:[#allocation3 + $0x8] sm:$0xff] %v224
    // Predicated region
    $region38: #{tpu_custom_call.1} parent=1 // pred_check
      %p227 = pneg %p54
    $region39: #{tpu_custom_call.1} parent=1 // pred_check_branch
      %229 = sbr.rel (%p227) target = $region41
    $region40: #{tpu_custom_call.1} parent=1 // pred_region
      %s230 = smul.u32 0, 128
      %s231 = sshra.s32 %s230, 7
      %s232 = sand.u32 %s230, 127
      %s233 = scalar_lea.vmem [#allocation4], %s231
      %v234 = vld [vmem:[%s233] sm:$0xff]
      %v235 = vld [vmem:[%s233 + $0x8] sm:$0xff]
      %v236 = vld [vmem:[#allocation3] sm:$0xff]
      %v237 = vld [vmem:[#allocation3 + $0x8] sm:$0xff]
      %v238 = vld [vmem:[%s2] sm:$0x1]
      %v240 = vperm.slane %v238, 0
      %v242 = vadd.f32 %v236, %v240
      %v243 = vadd.f32 %v237, %v240
      %v244 = vadd.f32 %v234, %v242
      %v245 = vadd.f32 %v235, %v243
      %246 = vst [vmem:[#allocation9] sm:$0xff] %v244
      %247 = vst [vmem:[#allocation9 + $0x8] sm:$0xff] %v245
    $region41: #{tpu_custom_call.1} parent=1 // pred_fallthru
      _
    // Predicated region
    $region42: #{tpu_custom_call.1} parent=1 // pred_check
      _
    $region43: #{tpu_custom_call.1} parent=1 // pred_check_branch
      %249 = sbr.rel (0) target = $region45
    $region44: #{tpu_custom_call.1} parent=1 // pred_region
      %251 = vsyncadd [#allocation6], 0
      %s252 = sshll.u32 [#allocation9], 4
      %s253 = int_to_ptr.vmem [resolvable:$true] %s252
      %s254 = sshll.u32 %s5, 4
      %s255 = int_to_ptr.hbm [resolvable:$true] %s254
      %260 = dma.vmem_to_hbm [thread:$0]  %s253, 256, %s255, [#allocation6], 128, 128, 8
    $region45: #{tpu_custom_call.1} parent=1 // pred_fallthru
      _
    // Predicated region
    $region46: #{tpu_custom_call.1} parent=1 // pred_check
      _
    $region47: #{tpu_custom_call.1} parent=1 // pred_check_branch
      %262 = sbr.rel (0) target = $region49
    $region48: #{tpu_custom_call.1} parent=1 // pred_region
      %264 = dma.done [#allocation6], 256
    $region49: #{tpu_custom_call.1} parent=1 // pred_fallthru
      _
    %265 = vsyncpa [#allocation5], 1
    %266 = vsyncpa [#allocation8], 1
    %267 = vsyncpa [#allocation6], 1

</llo_original>
